<compile_context>
chip_gen: v6e
topology: v6e:2x2x1
jax: 0.10.0
libtpu: 0.0.40
codegen_flags: <defaults>
</compile_context>

<pallas_src>
import functools

import jax
import jax.numpy as jnp
from jax.experimental import pallas as pl
from jax.experimental.pallas import tpu as pltpu


# ------------------------------ Pallas kernel ------------------------------- #

def _pick_time_chunk(T, H):
    """Smallest divisor of T whose packed lane width (chunk*H) is a multiple of
    128 (lane-dense stores); falls back to the largest small divisor of T."""
    for c in range(1, T + 1):
        if T % c == 0 and (c * H) % 128 == 0:
            return c
    for c in (8, 4, 2, 1):
        if T % c == 0:
            return c
    return 1


def _recurrence_kernel(gz_ref, w_ref, hseq_ref, hcfin_ref, h_st, c_st,
                       *, hidden_dim, num_layers, time_chunk):
    """One grid step = one (batch block, time chunk) of the stacked recurrence.

    gz_ref   : (TC, L, BB, 4H) f32   hoisted gate pre-activations (x/z/mass/bias),
                                     gate order [f, i, c, o].
    w_ref    : (H + (L-1)*2H, 4H) bf16  rows = [Wh_0 ; Wx_1;Wh_1 ; Wx_2;Wh_2 ; ...]
    hseq_ref : (1, BB, TC*H) f32     lane-dense packed top-layer h for this chunk.
    hcfin_ref: (L, BB, 2H) f32       merged final [h | c] per layer.
    h_st/c_st: (L, BB, H) f32 VMEM   recurrent state carried across grid steps.
    """
    H, L, TC = hidden_dim, num_layers, time_chunk
    t_blk = pl.program_id(1)

    # Re-initialize the carried state at the first time chunk of each batch block.
    @pl.when(t_blk == 0)
    def _():
        h_st[...] = jnp.zeros_like(h_st)
        c_st[...] = jnp.zeros_like(c_st)

    # Recurrent weights (bf16), loaded once per chunk.  For H >> 32 push these
    # loads inside the layer loop instead (vld slots have slack; vregs do not).
    w0 = w_ref[0:H, :]                                       # layer 0: h -> gates
    wcat = [w_ref[H + (l - 1) * 2 * H: H + l * 2 * H, :]     # layer l>0: [x;h] -> gates
            for l in range(1, L)]

    hs = [h_st[l] for l in range(L)]
    cs = [c_st[l] for l in range(L)]

    h_tops = []
    # Static chunk-local time loop == capped unroll: instruction footprint is
    # O(TC * L), independent of the full sequence length.
    for s in range(TC):
        x_in = None
        for l in range(L):
            g = gz_ref[s, l]                                 # (BB, 4H) hoisted part, f32
            if l == 0:
                g = g + jnp.dot(hs[0].astype(jnp.bfloat16), w0,
                                preferred_element_type=jnp.float32)
            else:
                # Fused x/h matmul: one K=2H dot instead of two K=H dots.
                lhs = jnp.concatenate([x_in, hs[l]], axis=-1).astype(jnp.bfloat16)
                g = g + jnp.dot(lhs, wcat[l - 1],
                                preferred_element_type=jnp.float32)

            # Full-width nonlinearities (2 EUP passes over the whole (BB,4H)
            # vreg), then slice out the [f, i, c, o] strips.
            sig = jax.nn.sigmoid(g)
            th = jnp.tanh(g)
            f_t = sig[:, 0:H]
            i_t = sig[:, H:2 * H]
            c_hat = th[:, 2 * H:3 * H]
            o_t = sig[:, 3 * H:4 * H]

            c_new = f_t * cs[l] + i_t * c_hat
            h_new = o_t * jnp.tanh(c_new)
            # TODO(synk): nn.Dropout(0.2) on h_t is identity in eval mode;
            # train-mode dropout between stacked cells is not implemented.
            hs[l], cs[l] = h_new, c_new
            x_in = h_new
        h_tops.append(x_in)

    # Carry state to the next chunk.
    for l in range(L):
        h_st[l] = hs[l]
        c_st[l] = cs[l]

    # Lane-dense packed store of the top-layer outputs for this chunk.
    hseq_ref[0] = jnp.concatenate(h_tops, axis=-1)           # (BB, TC*H)

    # Final states, written exactly once per batch block (merged h|c store).
    @pl.when(t_blk == pl.num_programs(1) - 1)
    def _():
        hcfin_ref[...] = jnp.concatenate(
            [jnp.stack(hs), jnp.stack(cs)], axis=-1)          # (L, BB, 2H)


# --------------------------- parameters & wrapper --------------------------- #

def init_params(key, input_dim, hidden_dim, additional_dim, num_layers, output_dim):
    params = []
    dims_in = [input_dim] + [hidden_dim] * (num_layers - 1)
    scale = 0.1
    for layer in range(num_layers):
        d_in = dims_in[layer]
        key, k0, k1, k2, k3, k4 = jax.random.split(key, 6)
        wx = scale * jax.random.normal(k0, (d_in, 4 * hidden_dim), jnp.float32)
        wh = scale * jax.random.normal(k1, (hidden_dim, 4 * hidden_dim), jnp.float32)
        wz = scale * jax.random.normal(k2, (additional_dim, 4 * hidden_dim), jnp.float32)
        wm = scale * jax.random.normal(k3, (1, 4 * hidden_dim), jnp.float32)
        # Combined bias = Linear(W_*) bias + extra b_* parameter.
        b = scale * jax.random.normal(k4, (1, 4 * hidden_dim), jnp.float32)
        params.append((wx, wh, wz, wm, b))
    key, kf1, kf2 = jax.random.split(key, 3)
    wfc = scale * jax.random.normal(kf1, (hidden_dim, output_dim), jnp.float32)
    bfc = scale * jax.random.normal(kf2, (output_dim,), jnp.float32)
    return params, (wfc, bfc)


def adaptive_lstm_forward(params, fc_params, x, z, mass, hidden_dim, num_layers):
    """Mirrors AdaptiveLSTM.forward with h0 = c0 = zeros (eval mode)."""
    B, T, _ = x.shape
    H, L = hidden_dim, num_layers
    Bp = ((B + 7) // 8) * 8                 # pad batch to full sublane groups
    BB = 8                                  # batch rows per grid block (parallel axis)
    TC = _pick_time_chunk(T, H)             # timesteps per grid step (lane-dense pack)
    NT = T // TC

    def to_time_major_padded(a):
        a = jnp.transpose(a, (1, 0, 2))     # (T, B, D)
        pad = Bp - B
        if pad:
            a = jnp.pad(a, ((0, 0), (0, pad), (0, 0)))
        return a

    x_seq = to_time_major_padded(x)         # (T, Bp, D_in)
    z_seq = to_time_major_padded(z)         # (T, Bp, D_z)
    m_seq = to_time_major_padded(mass)      # (T, Bp, 1)

    # Hoisted, h-independent gate pre-activations, t-major: (T, L, Bp, 4H).
    gz_blocks = []
    for l, (wx, wh, wz, wm, b) in enumerate(params):
        g = (jnp.einsum('tbd,dk->tbk', z_seq, wz)
             + jnp.einsum('tbd,dk->tbk', m_seq, wm) + b)
        if l == 0:
            g = g + jnp.einsum('tbd,dk->tbk', x_seq, wx)
        gz_blocks.append(g)
    gz = jnp.stack(gz_blocks, axis=1)       # (T, L, Bp, 4H)

    # Recurrent weights: layer 0 -> Wh only (its x-projection is hoisted);
    # layers l>0 -> fused [Wx; Wh] so the x/h matmuls become one K=2H dot.
    w_rows = [params[0][1]] + [jnp.concatenate([params[l][0], params[l][1]], axis=0)
                               for l in range(1, L)]
    w_all = jnp.concatenate(w_rows, axis=0).astype(jnp.bfloat16)
    WR = w_all.shape[0]                     # H + (L-1)*2H

    kernel = functools.partial(_recurrence_kernel, hidden_dim=H,
                               num_layers=L, time_chunk=TC)

    # Explicit VMEM budget: double-buffered streamed tiles + weights + scratch.
    f32b, bf16b = 4, 2
    need = (2 * (TC * L * BB * 4 * H * f32b          # gz chunk
                 + WR * 4 * H * bf16b                # fused weights
                 + BB * TC * H * f32b                # packed h chunk
                 + L * BB * 2 * H * f32b)            # merged finals
            + 2 * L * BB * H * f32b)                 # h/c scratch
    vmem_limit = min(max(4 * need, 8 * 1024 * 1024), 64 * 1024 * 1024)

    grid = (Bp // BB, NT)
    h_seq_packed, hc_fin = pl.pallas_call(
        kernel,
        out_shape=(jax.ShapeDtypeStruct((NT, Bp, TC * H), jnp.float32),
                   jax.ShapeDtypeStruct((L, Bp, 2 * H), jnp.float32)),
        grid_spec=pltpu.PrefetchScalarGridSpec(
            num_scalar_prefetch=0,
            grid=grid,
            in_specs=[
                pl.BlockSpec((TC, L, BB, 4 * H), lambda b, t: (t, 0, b, 0)),
                pl.BlockSpec((WR, 4 * H), lambda b, t: (0, 0)),
            ],
            out_specs=[
                pl.BlockSpec((1, BB, TC * H), lambda b, t: (t, b, 0)),
                pl.BlockSpec((L, BB, 2 * H), lambda b, t: (0, b, 0)),
            ],
            scratch_shapes=[pltpu.VMEM((L, BB, H), jnp.float32),
                            pltpu.VMEM((L, BB, H), jnp.float32)]),
        compiler_params=pltpu.CompilerParams(
            dimension_semantics=("parallel", "arbitrary"),
            vmem_limit_bytes=int(vmem_limit)),
    )(gz, w_all)

    # Unpack the lane-dense chunked output back to (B, T, H).
    h_seq = (h_seq_packed.reshape(NT, Bp, TC, H)
             .transpose(0, 2, 1, 3)
             .reshape(T, Bp, H))
    outputs = jnp.transpose(h_seq[:, :B, :], (1, 0, 2))      # (B, T, H)

    wfc, bfc = fc_params
    y = outputs @ wfc + bfc                                  # tiny FC: plain XLA
    h_fin = hc_fin[:, :B, :H]
    c_fin = hc_fin[:, :B, H:]
    return y, (h_fin, c_fin)


def reference_forward(params, fc_params, x, z, mass, hidden_dim, num_layers):
    """Pure-JAX f32 reference (same math) for correctness checking."""
    b_sz, t_len, _ = x.shape
    H = hidden_dim
    h = [jnp.zeros((b_sz, H), jnp.float32) for _ in range(num_layers)]
    c = [jnp.zeros((b_sz, H), jnp.float32) for _ in range(num_layers)]
    outs = []
    for t in range(t_len):
        x_t, z_t, m_t = x[:, t, :], z[:, t, :], mass[:, t, :]
        for layer in range(num_layers):
            wx, wh, wz, wm, b = params[layer]
            g = x_t @ wx + h[layer] @ wh + z_t @ wz + m_t @ wm + b
            f_t = jax.nn.sigmoid(g[:, :H])
            i_t = jax.nn.sigmoid(g[:, H:2 * H])
            c_hat = jnp.tanh(g[:, 2 * H:3 * H])
            o_t = jax.nn.sigmoid(g[:, 3 * H:4 * H])
            c[layer] = f_t * c[layer] + i_t * c_hat
            h[layer] = o_t * jnp.tanh(c[layer])
            x_t = h[layer]
        outs.append(h[-1])
    outputs = jnp.stack(outs, axis=1)
    wfc, bfc = fc_params
    return outputs @ wfc + bfc, (jnp.stack(h), jnp.stack(c))


# ---------------------------------- main ----------------------------------- #

if __name__ == "__main__":
    INPUT_DIM, HIDDEN_DIM, ADD_DIM = 8, 32, 4
    NUM_LAYERS, OUTPUT_DIM = 2, 3
    B, T = 2, 8

    key = jax.random.PRNGKey(0)
    key, kx, kz, km, kp = jax.random.split(key, 5)
    x = jax.random.normal(kx, (B, T, INPUT_DIM), jnp.float32)
    z = jax.random.normal(kz, (B, T, ADD_DIM), jnp.float32)
    mass = jax.random.normal(km, (B, T, 1), jnp.float32)

    params, fc_params = init_params(kp, INPUT_DIM, HIDDEN_DIM, ADD_DIM,
                                    NUM_LAYERS, OUTPUT_DIM)

    fwd = jax.jit(adaptive_lstm_forward, static_argnums=(5, 6))
    y, (h_n, c_n) = fwd(params, fc_params, x, z, mass, HIDDEN_DIM, NUM_LAYERS)
    jax.block_until_ready((y, h_n, c_n))

    y_ref, (h_ref, c_ref) = reference_forward(params, fc_params, x, z, mass,
                                              HIDDEN_DIM, NUM_LAYERS)
    assert y.shape == (B, T, OUTPUT_DIM)
    assert h_n.shape == (NUM_LAYERS, B, HIDDEN_DIM)
    assert c_n.shape == (NUM_LAYERS, B, HIDDEN_DIM)
    # Tolerance accounts for bf16 MXU inputs on the recurrent matmuls (f32
    # accumulate / f32 elementwise) and the reordered hoisted f32 summations.
    assert jnp.allclose(y, y_ref, atol=2e-2, rtol=2e-2)
    assert jnp.allclose(h_n, h_ref, atol=2e-2, rtol=2e-2)
    assert jnp.allclose(c_n, c_ref, atol=2e-2, rtol=2e-2)

    print("KERNEL_OK")
</pallas_src>

<mosaic_0001>
module attributes {stable_mosaic.version = 11 : i64} {
  func.func @_recurrence_kernel(%arg0: i32, %arg1: i32, %arg2: memref<4x2x8x128xf32, #tpu.memory_space<vmem>>, %arg3: memref<96x128xbf16, #tpu.memory_space<vmem>>, %arg4: memref<1x8x128xf32, #tpu.memory_space<vmem>>, %arg5: memref<2x8x64xf32, #tpu.memory_space<vmem>>, %arg6: memref<2x8x32xf32, #tpu.memory_space<vmem>>, %arg7: memref<2x8x32xf32, #tpu.memory_space<vmem>>) attributes {dimension_semantics = [#tpu.dimension_semantics<parallel>, #tpu.dimension_semantics<arbitrary>], iteration_bounds = array<i64: 1, 2>, scalar_prefetch = 0 : i64, scratch_operands = 2 : i64, tpu.core_type = #tpu.core_type<tc>, window_params = [{transform_indices = @transform_0, window_bounds = array<i64: 4, 2, 8, 128>}, {pipeline_mode = #tpu.pipeline_mode<synchronous>, transform_indices = @transform_1, window_bounds = array<i64: 96, 128>}, {transform_indices = @transform_2, window_bounds = array<i64: 1, 8, 128>}, {transform_indices = @transform_3, window_bounds = array<i64: 2, 8, 64>}]} {
    %c0_i32 = arith.constant 0 : i32
    %0 = arith.cmpi eq, %arg1, %c0_i32 : i32
    %1 = arith.extui %0 : i1 to i32
    %c0_i32_0 = arith.constant 0 : i32
    %2 = arith.cmpi ne, %1, %c0_i32_0 : i32
    scf.if %2 {
      %cst_75 = arith.constant 0.000000e+00 : f32
      %196 = vector.broadcast %cst_75 : f32 to vector<2x8x32xf32>
      %c0_76 = arith.constant 0 : index
      %c0_77 = arith.constant 0 : index
      %c0_78 = arith.constant 0 : index
      %197 = vector.load %arg6[%c0_76, %c0_77, %c0_78] : memref<2x8x32xf32, #tpu.memory_space<vmem>>, vector<2x8x32xf32>
      tpu.vector_store %arg6[%c0_76, %c0_77, %c0_78], %196 {strides = array<i32>} : memref<2x8x32xf32, #tpu.memory_space<vmem>>, vector<2x8x32xf32>,
      %cst_79 = arith.constant 0.000000e+00 : f32
      %198 = vector.broadcast %cst_79 : f32 to vector<2x8x32xf32>
      %c0_80 = arith.constant 0 : index
      %c0_81 = arith.constant 0 : index
      %c0_82 = arith.constant 0 : index
      %199 = vector.load %arg7[%c0_80, %c0_81, %c0_82] : memref<2x8x32xf32, #tpu.memory_space<vmem>>, vector<2x8x32xf32>
      tpu.vector_store %arg7[%c0_80, %c0_81, %c0_82], %198 {strides = array<i32>} : memref<2x8x32xf32, #tpu.memory_space<vmem>>, vector<2x8x32xf32>,
    } else {
    }
    %c0 = arith.constant 0 : index
    %c0_1 = arith.constant 0 : index
    %3 = vector.load %arg3[%c0, %c0_1] : memref<96x128xbf16, #tpu.memory_space<vmem>>, vector<32x128xbf16>
    %c32 = arith.constant 32 : index
    %c0_2 = arith.constant 0 : index
    %4 = vector.load %arg3[%c32, %c0_2] : memref<96x128xbf16, #tpu.memory_space<vmem>>, vector<64x128xbf16>
    %c0_3 = arith.constant 0 : index
    %c0_4 = arith.constant 0 : index
    %c0_5 = arith.constant 0 : index
    %5 = vector.load %arg6[%c0_3, %c0_4, %c0_5] : memref<2x8x32xf32, #tpu.memory_space<vmem>>, vector<1x8x32xf32>
    %6 = vector.shape_cast %5 : vector<1x8x32xf32> to vector<8x32xf32>
    %c1 = arith.constant 1 : index
    %c0_6 = arith.constant 0 : index
    %c0_7 = arith.constant 0 : index
    %7 = vector.load %arg6[%c1, %c0_6, %c0_7] : memref<2x8x32xf32, #tpu.memory_space<vmem>>, vector<1x8x32xf32>
    %8 = vector.shape_cast %7 : vector<1x8x32xf32> to vector<8x32xf32>
    %c0_8 = arith.constant 0 : index
    %c0_9 = arith.constant 0 : index
    %c0_10 = arith.constant 0 : index
    %9 = vector.load %arg7[%c0_8, %c0_9, %c0_10] : memref<2x8x32xf32, #tpu.memory_space<vmem>>, vector<1x8x32xf32>
    %10 = vector.shape_cast %9 : vector<1x8x32xf32> to vector<8x32xf32>
    %c1_11 = arith.constant 1 : index
    %c0_12 = arith.constant 0 : index
    %c0_13 = arith.constant 0 : index
    %11 = vector.load %arg7[%c1_11, %c0_12, %c0_13] : memref<2x8x32xf32, #tpu.memory_space<vmem>>, vector<1x8x32xf32>
    %12 = vector.shape_cast %11 : vector<1x8x32xf32> to vector<8x32xf32>
    %c0_14 = arith.constant 0 : index
    %c0_15 = arith.constant 0 : index
    %c0_16 = arith.constant 0 : index
    %c0_17 = arith.constant 0 : index
    %13 = vector.load %arg2[%c0_14, %c0_15, %c0_16, %c0_17] : memref<4x2x8x128xf32, #tpu.memory_space<vmem>>, vector<1x1x8x128xf32>
    %14 = vector.shape_cast %13 : vector<1x1x8x128xf32> to vector<8x128xf32>
    %15 = arith.truncf %6 : vector<8x32xf32> to vector<8x32xbf16>
    %cst = arith.constant dense<0.000000e+00> : vector<8x128xf32>
    %16 = tpu.matmul %15, %3, %cst {dimension_numbers = #tpu.dot_dimension_numbers<[1], [0], [0], [1], [0, 0, 1, 1], [], []>} : vector<8x32xbf16>, vector<32x128xbf16>, vector<8x128xf32> -> vector<8x128xf32>
    %17 = arith.addf %14, %16 : vector<8x128xf32>
    %18 = arith.negf %17 : vector<8x128xf32>
    %19 = math.exp %18 : vector<8x128xf32>
    %cst_18 = arith.constant 1.000000e+00 : f32
    %20 = vector.broadcast %cst_18 : f32 to vector<8x128xf32>
    %21 = arith.addf %20, %19 : vector<8x128xf32>
    %22 = arith.divf %20, %21 : vector<8x128xf32>
    %23 = math.tanh %17 : vector<8x128xf32>
    %24 = vector.extract_strided_slice %22 {offsets = [0, 0], sizes = [8, 32], strides = [1, 1]} : vector<8x128xf32> to vector<8x32xf32>
    %25 = vector.extract_strided_slice %22 {offsets = [0, 32], sizes = [8, 32], strides = [1, 1]} : vector<8x128xf32> to vector<8x32xf32>
    %26 = vector.extract_strided_slice %23 {offsets = [0, 64], sizes = [8, 32], strides = [1, 1]} : vector<8x128xf32> to vector<8x32xf32>
    %27 = vector.extract_strided_slice %22 {offsets = [0, 96], sizes = [8, 32], strides = [1, 1]} : vector<8x128xf32> to vector<8x32xf32>
    %28 = arith.mulf %24, %10 : vector<8x32xf32>
    %29 = arith.mulf %25, %26 : vector<8x32xf32>
    %30 = arith.addf %28, %29 : vector<8x32xf32>
    %31 = math.tanh %30 : vector<8x32xf32>
    %32 = arith.mulf %27, %31 : vector<8x32xf32>
    %c0_19 = arith.constant 0 : index
    %c1_20 = arith.constant 1 : index
    %c0_21 = arith.constant 0 : index
    %c0_22 = arith.constant 0 : index
    %33 = vector.load %arg2[%c0_19, %c1_20, %c0_21, %c0_22] : memref<4x2x8x128xf32, #tpu.memory_space<vmem>>, vector<1x1x8x128xf32>
    %34 = vector.shape_cast %33 : vector<1x1x8x128xf32> to vector<8x128xf32>
    %35 = tpu.concatenate %32, %8 in 1 : vector<8x32xf32>, vector<8x32xf32> -> vector<8x64xf32>
    %36 = arith.truncf %35 : vector<8x64xf32> to vector<8x64xbf16>
    %cst_23 = arith.constant dense<0.000000e+00> : vector<8x128xf32>
    %37 = tpu.matmul %36, %4, %cst_23 {dimension_numbers = #tpu.dot_dimension_numbers<[1], [0], [0], [1], [0, 0, 1, 1], [], []>} : vector<8x64xbf16>, vector<64x128xbf16>, vector<8x128xf32> -> vector<8x128xf32>
    %38 = arith.addf %34, %37 : vector<8x128xf32>
    %39 = arith.negf %38 : vector<8x128xf32>
    %40 = math.exp %39 : vector<8x128xf32>
    %cst_24 = arith.constant 1.000000e+00 : f32
    %41 = vector.broadcast %cst_24 : f32 to vector<8x128xf32>
    %42 = arith.addf %41, %40 : vector<8x128xf32>
    %43 = arith.divf %41, %42 : vector<8x128xf32>
    %44 = math.tanh %38 : vector<8x128xf32>
    %45 = vector.extract_strided_slice %43 {offsets = [0, 0], sizes = [8, 32], strides = [1, 1]} : vector<8x128xf32> to vector<8x32xf32>
    %46 = vector.extract_strided_slice %43 {offsets = [0, 32], sizes = [8, 32], strides = [1, 1]} : vector<8x128xf32> to vector<8x32xf32>
    %47 = vector.extract_strided_slice %44 {offsets = [0, 64], sizes = [8, 32], strides = [1, 1]} : vector<8x128xf32> to vector<8x32xf32>
    %48 = vector.extract_strided_slice %43 {offsets = [0, 96], sizes = [8, 32], strides = [1, 1]} : vector<8x128xf32> to vector<8x32xf32>
    %49 = arith.mulf %45, %12 : vector<8x32xf32>
    %50 = arith.mulf %46, %47 : vector<8x32xf32>
    %51 = arith.addf %49, %50 : vector<8x32xf32>
    %52 = math.tanh %51 : vector<8x32xf32>
    %53 = arith.mulf %48, %52 : vector<8x32xf32>
    %c1_25 = arith.constant 1 : index
    %c0_26 = arith.constant 0 : index
    %c0_27 = arith.constant 0 : index
    %c0_28 = arith.constant 0 : index
    %54 = vector.load %arg2[%c1_25, %c0_26, %c0_27, %c0_28] : memref<4x2x8x128xf32, #tpu.memory_space<vmem>>, vector<1x1x8x128xf32>
    %55 = vector.shape_cast %54 : vector<1x1x8x128xf32> to vector<8x128xf32>
    %56 = arith.truncf %32 : vector<8x32xf32> to vector<8x32xbf16>
    %cst_29 = arith.constant dense<0.000000e+00> : vector<8x128xf32>
    %57 = tpu.matmul %56, %3, %cst_29 {dimension_numbers = #tpu.dot_dimension_numbers<[1], [0], [0], [1], [0, 0, 1, 1], [], []>} : vector<8x32xbf16>, vector<32x128xbf16>, vector<8x128xf32> -> vector<8x128xf32>
    %58 = arith.addf %55, %57 : vector<8x128xf32>
    %59 = arith.negf %58 : vector<8x128xf32>
    %60 = math.exp %59 : vector<8x128xf32>
    %cst_30 = arith.constant 1.000000e+00 : f32
    %61 = vector.broadcast %cst_30 : f32 to vector<8x128xf32>
    %62 = arith.addf %61, %60 : vector<8x128xf32>
    %63 = arith.divf %61, %62 : vector<8x128xf32>
    %64 = math.tanh %58 : vector<8x128xf32>
    %65 = vector.extract_strided_slice %63 {offsets = [0, 0], sizes = [8, 32], strides = [1, 1]} : vector<8x128xf32> to vector<8x32xf32>
    %66 = vector.extract_strided_slice %63 {offsets = [0, 32], sizes = [8, 32], strides = [1, 1]} : vector<8x128xf32> to vector<8x32xf32>
    %67 = vector.extract_strided_slice %64 {offsets = [0, 64], sizes = [8, 32], strides = [1, 1]} : vector<8x128xf32> to vector<8x32xf32>
    %68 = vector.extract_strided_slice %63 {offsets = [0, 96], sizes = [8, 32], strides = [1, 1]} : vector<8x128xf32> to vector<8x32xf32>
    %69 = arith.mulf %65, %30 : vector<8x32xf32>
    %70 = arith.mulf %66, %67 : vector<8x32xf32>
    %71 = arith.addf %69, %70 : vector<8x32xf32>
    %72 = math.tanh %71 : vector<8x32xf32>
    %73 = arith.mulf %68, %72 : vector<8x32xf32>
    %c1_31 = arith.constant 1 : index
    %c1_32 = arith.constant 1 : index
    %c0_33 = arith.constant 0 : index
    %c0_34 = arith.constant 0 : index
    %74 = vector.load %arg2[%c1_31, %c1_32, %c0_33, %c0_34] : memref<4x2x8x128xf32, #tpu.memory_space<vmem>>, vector<1x1x8x128xf32>
    %75 = vector.shape_cast %74 : vector<1x1x8x128xf32> to vector<8x128xf32>
    %76 = tpu.concatenate %73, %53 in 1 : vector<8x32xf32>, vector<8x32xf32> -> vector<8x64xf32>
    %77 = arith.truncf %76 : vector<8x64xf32> to vector<8x64xbf16>
    %cst_35 = arith.constant dense<0.000000e+00> : vector<8x128xf32>
    %78 = tpu.matmul %77, %4, %cst_35 {dimension_numbers = #tpu.dot_dimension_numbers<[1], [0], [0], [1], [0, 0, 1, 1], [], []>} : vector<8x64xbf16>, vector<64x128xbf16>, vector<8x128xf32> -> vector<8x128xf32>
    %79 = arith.addf %75, %78 : vector<8x128xf32>
    %80 = arith.negf %79 : vector<8x128xf32>
    %81 = math.exp %80 : vector<8x128xf32>
    %cst_36 = arith.constant 1.000000e+00 : f32
    %82 = vector.broadcast %cst_36 : f32 to vector<8x128xf32>
    %83 = arith.addf %82, %81 : vector<8x128xf32>
    %84 = arith.divf %82, %83 : vector<8x128xf32>
    %85 = math.tanh %79 : vector<8x128xf32>
    %86 = vector.extract_strided_slice %84 {offsets = [0, 0], sizes = [8, 32], strides = [1, 1]} : vector<8x128xf32> to vector<8x32xf32>
    %87 = vector.extract_strided_slice %84 {offsets = [0, 32], sizes = [8, 32], strides = [1, 1]} : vector<8x128xf32> to vector<8x32xf32>
    %88 = vector.extract_strided_slice %85 {offsets = [0, 64], sizes = [8, 32], strides = [1, 1]} : vector<8x128xf32> to vector<8x32xf32>
    %89 = vector.extract_strided_slice %84 {offsets = [0, 96], sizes = [8, 32], strides = [1, 1]} : vector<8x128xf32> to vector<8x32xf32>
    %90 = arith.mulf %86, %51 : vector<8x32xf32>
    %91 = arith.mulf %87, %88 : vector<8x32xf32>
    %92 = arith.addf %90, %91 : vector<8x32xf32>
    %93 = math.tanh %92 : vector<8x32xf32>
    %94 = arith.mulf %89, %93 : vector<8x32xf32>
    %c2 = arith.constant 2 : index
    %c0_37 = arith.constant 0 : index
    %c0_38 = arith.constant 0 : index
    %c0_39 = arith.constant 0 : index
    %95 = vector.load %arg2[%c2, %c0_37, %c0_38, %c0_39] : memref<4x2x8x128xf32, #tpu.memory_space<vmem>>, vector<1x1x8x128xf32>
    %96 = vector.shape_cast %95 : vector<1x1x8x128xf32> to vector<8x128xf32>
    %97 = arith.truncf %73 : vector<8x32xf32> to vector<8x32xbf16>
    %cst_40 = arith.constant dense<0.000000e+00> : vector<8x128xf32>
    %98 = tpu.matmul %97, %3, %cst_40 {dimension_numbers = #tpu.dot_dimension_numbers<[1], [0], [0], [1], [0, 0, 1, 1], [], []>} : vector<8x32xbf16>, vector<32x128xbf16>, vector<8x128xf32> -> vector<8x128xf32>
    %99 = arith.addf %96, %98 : vector<8x128xf32>
    %100 = arith.negf %99 : vector<8x128xf32>
    %101 = math.exp %100 : vector<8x128xf32>
    %cst_41 = arith.constant 1.000000e+00 : f32
    %102 = vector.broadcast %cst_41 : f32 to vector<8x128xf32>
    %103 = arith.addf %102, %101 : vector<8x128xf32>
    %104 = arith.divf %102, %103 : vector<8x128xf32>
    %105 = math.tanh %99 : vector<8x128xf32>
    %106 = vector.extract_strided_slice %104 {offsets = [0, 0], sizes = [8, 32], strides = [1, 1]} : vector<8x128xf32> to vector<8x32xf32>
    %107 = vector.extract_strided_slice %104 {offsets = [0, 32], sizes = [8, 32], strides = [1, 1]} : vector<8x128xf32> to vector<8x32xf32>
    %108 = vector.extract_strided_slice %105 {offsets = [0, 64], sizes = [8, 32], strides = [1, 1]} : vector<8x128xf32> to vector<8x32xf32>
    %109 = vector.extract_strided_slice %104 {offsets = [0, 96], sizes = [8, 32], strides = [1, 1]} : vector<8x128xf32> to vector<8x32xf32>
    %110 = arith.mulf %106, %71 : vector<8x32xf32>
    %111 = arith.mulf %107, %108 : vector<8x32xf32>
    %112 = arith.addf %110, %111 : vector<8x32xf32>
    %113 = math.tanh %112 : vector<8x32xf32>
    %114 = arith.mulf %109, %113 : vector<8x32xf32>
    %c2_42 = arith.constant 2 : index
    %c1_43 = arith.constant 1 : index
    %c0_44 = arith.constant 0 : index
    %c0_45 = arith.constant 0 : index
    %115 = vector.load %arg2[%c2_42, %c1_43, %c0_44, %c0_45] : memref<4x2x8x128xf32, #tpu.memory_space<vmem>>, vector<1x1x8x128xf32>
    %116 = vector.shape_cast %115 : vector<1x1x8x128xf32> to vector<8x128xf32>
    %117 = tpu.concatenate %114, %94 in 1 : vector<8x32xf32>, vector<8x32xf32> -> vector<8x64xf32>
    %118 = arith.truncf %117 : vector<8x64xf32> to vector<8x64xbf16>
    %cst_46 = arith.constant dense<0.000000e+00> : vector<8x128xf32>
    %119 = tpu.matmul %118, %4, %cst_46 {dimension_numbers = #tpu.dot_dimension_numbers<[1], [0], [0], [1], [0, 0, 1, 1], [], []>} : vector<8x64xbf16>, vector<64x128xbf16>, vector<8x128xf32> -> vector<8x128xf32>
    %120 = arith.addf %116, %119 : vector<8x128xf32>
    %121 = arith.negf %120 : vector<8x128xf32>
    %122 = math.exp %121 : vector<8x128xf32>
    %cst_47 = arith.constant 1.000000e+00 : f32
    %123 = vector.broadcast %cst_47 : f32 to vector<8x128xf32>
    %124 = arith.addf %123, %122 : vector<8x128xf32>
    %125 = arith.divf %123, %124 : vector<8x128xf32>
    %126 = math.tanh %120 : vector<8x128xf32>
    %127 = vector.extract_strided_slice %125 {offsets = [0, 0], sizes = [8, 32], strides = [1, 1]} : vector<8x128xf32> to vector<8x32xf32>
    %128 = vector.extract_strided_slice %125 {offsets = [0, 32], sizes = [8, 32], strides = [1, 1]} : vector<8x128xf32> to vector<8x32xf32>
    %129 = vector.extract_strided_slice %126 {offsets = [0, 64], sizes = [8, 32], strides = [1, 1]} : vector<8x128xf32> to vector<8x32xf32>
    %130 = vector.extract_strided_slice %125 {offsets = [0, 96], sizes = [8, 32], strides = [1, 1]} : vector<8x128xf32> to vector<8x32xf32>
    %131 = arith.mulf %127, %92 : vector<8x32xf32>
    %132 = arith.mulf %128, %129 : vector<8x32xf32>
    %133 = arith.addf %131, %132 : vector<8x32xf32>
    %134 = math.tanh %133 : vector<8x32xf32>
    %135 = arith.mulf %130, %134 : vector<8x32xf32>
    %c3 = arith.constant 3 : index
    %c0_48 = arith.constant 0 : index
    %c0_49 = arith.constant 0 : index
    %c0_50 = arith.constant 0 : index
    %136 = vector.load %arg2[%c3, %c0_48, %c0_49, %c0_50] : memref<4x2x8x128xf32, #tpu.memory_space<vmem>>, vector<1x1x8x128xf32>
    %137 = vector.shape_cast %136 : vector<1x1x8x128xf32> to vector<8x128xf32>
    %138 = arith.truncf %114 : vector<8x32xf32> to vector<8x32xbf16>
    %cst_51 = arith.constant dense<0.000000e+00> : vector<8x128xf32>
    %139 = tpu.matmul %138, %3, %cst_51 {dimension_numbers = #tpu.dot_dimension_numbers<[1], [0], [0], [1], [0, 0, 1, 1], [], []>} : vector<8x32xbf16>, vector<32x128xbf16>, vector<8x128xf32> -> vector<8x128xf32>
    %140 = arith.addf %137, %139 : vector<8x128xf32>
    %141 = arith.negf %140 : vector<8x128xf32>
    %142 = math.exp %141 : vector<8x128xf32>
    %cst_52 = arith.constant 1.000000e+00 : f32
    %143 = vector.broadcast %cst_52 : f32 to vector<8x128xf32>
    %144 = arith.addf %143, %142 : vector<8x128xf32>
    %145 = arith.divf %143, %144 : vector<8x128xf32>
    %146 = math.tanh %140 : vector<8x128xf32>
    %147 = vector.extract_strided_slice %145 {offsets = [0, 0], sizes = [8, 32], strides = [1, 1]} : vector<8x128xf32> to vector<8x32xf32>
    %148 = vector.extract_strided_slice %145 {offsets = [0, 32], sizes = [8, 32], strides = [1, 1]} : vector<8x128xf32> to vector<8x32xf32>
    %149 = vector.extract_strided_slice %146 {offsets = [0, 64], sizes = [8, 32], strides = [1, 1]} : vector<8x128xf32> to vector<8x32xf32>
    %150 = vector.extract_strided_slice %145 {offsets = [0, 96], sizes = [8, 32], strides = [1, 1]} : vector<8x128xf32> to vector<8x32xf32>
    %151 = arith.mulf %147, %112 : vector<8x32xf32>
    %152 = arith.mulf %148, %149 : vector<8x32xf32>
    %153 = arith.addf %151, %152 : vector<8x32xf32>
    %154 = math.tanh %153 : vector<8x32xf32>
    %155 = arith.mulf %150, %154 : vector<8x32xf32>
    %c3_53 = arith.constant 3 : index
    %c1_54 = arith.constant 1 : index
    %c0_55 = arith.constant 0 : index
    %c0_56 = arith.constant 0 : index
    %156 = vector.load %arg2[%c3_53, %c1_54, %c0_55, %c0_56] : memref<4x2x8x128xf32, #tpu.memory_space<vmem>>, vector<1x1x8x128xf32>
    %157 = vector.shape_cast %156 : vector<1x1x8x128xf32> to vector<8x128xf32>
    %158 = tpu.concatenate %155, %135 in 1 : vector<8x32xf32>, vector<8x32xf32> -> vector<8x64xf32>
    %159 = arith.truncf %158 : vector<8x64xf32> to vector<8x64xbf16>
    %cst_57 = arith.constant dense<0.000000e+00> : vector<8x128xf32>
    %160 = tpu.matmul %159, %4, %cst_57 {dimension_numbers = #tpu.dot_dimension_numbers<[1], [0], [0], [1], [0, 0, 1, 1], [], []>} : vector<8x64xbf16>, vector<64x128xbf16>, vector<8x128xf32> -> vector<8x128xf32>
    %161 = arith.addf %157, %160 : vector<8x128xf32>
    %162 = arith.negf %161 : vector<8x128xf32>
    %163 = math.exp %162 : vector<8x128xf32>
    %cst_58 = arith.constant 1.000000e+00 : f32
    %164 = vector.broadcast %cst_58 : f32 to vector<8x128xf32>
    %165 = arith.addf %164, %163 : vector<8x128xf32>
    %166 = arith.divf %164, %165 : vector<8x128xf32>
    %167 = math.tanh %161 : vector<8x128xf32>
    %168 = vector.extract_strided_slice %166 {offsets = [0, 0], sizes = [8, 32], strides = [1, 1]} : vector<8x128xf32> to vector<8x32xf32>
    %169 = vector.extract_strided_slice %166 {offsets = [0, 32], sizes = [8, 32], strides = [1, 1]} : vector<8x128xf32> to vector<8x32xf32>
    %170 = vector.extract_strided_slice %167 {offsets = [0, 64], sizes = [8, 32], strides = [1, 1]} : vector<8x128xf32> to vector<8x32xf32>
    %171 = vector.extract_strided_slice %166 {offsets = [0, 96], sizes = [8, 32], strides = [1, 1]} : vector<8x128xf32> to vector<8x32xf32>
    %172 = arith.mulf %168, %133 : vector<8x32xf32>
    %173 = arith.mulf %169, %170 : vector<8x32xf32>
    %174 = arith.addf %172, %173 : vector<8x32xf32>
    %175 = math.tanh %174 : vector<8x32xf32>
    %176 = arith.mulf %171, %175 : vector<8x32xf32>
    %c0_59 = arith.constant 0 : index
    %c0_60 = arith.constant 0 : index
    %c0_61 = arith.constant 0 : index
    %177 = vector.load %arg6[%c0_59, %c0_60, %c0_61] : memref<2x8x32xf32, #tpu.memory_space<vmem>>, vector<1x8x32xf32>
    %178 = vector.shape_cast %177 : vector<1x8x32xf32> to vector<8x32xf32>
    %179 = vector.shape_cast %155 : vector<8x32xf32> to vector<1x8x32xf32>
    tpu.vector_store %arg6[%c0_59, %c0_60, %c0_61], %179 {strides = array<i32>} : memref<2x8x32xf32, #tpu.memory_space<vmem>>, vector<1x8x32xf32>,
    %c0_62 = arith.constant 0 : index
    %c0_63 = arith.constant 0 : index
    %c0_64 = arith.constant 0 : index
    %180 = vector.load %arg7[%c0_62, %c0_63, %c0_64] : memref<2x8x32xf32, #tpu.memory_space<vmem>>, vector<1x8x32xf32>
    %181 = vector.shape_cast %180 : vector<1x8x32xf32> to vector<8x32xf32>
    %182 = vector.shape_cast %153 : vector<8x32xf32> to vector<1x8x32xf32>
    tpu.vector_store %arg7[%c0_62, %c0_63, %c0_64], %182 {strides = array<i32>} : memref<2x8x32xf32, #tpu.memory_space<vmem>>, vector<1x8x32xf32>,
    %c1_65 = arith.constant 1 : index
    %c0_66 = arith.constant 0 : index
    %c0_67 = arith.constant 0 : index
    %183 = vector.load %arg6[%c1_65, %c0_66, %c0_67] : memref<2x8x32xf32, #tpu.memory_space<vmem>>, vector<1x8x32xf32>
    %184 = vector.shape_cast %183 : vector<1x8x32xf32> to vector<8x32xf32>
    %185 = vector.shape_cast %176 : vector<8x32xf32> to vector<1x8x32xf32>
    tpu.vector_store %arg6[%c1_65, %c0_66, %c0_67], %185 {strides = array<i32>} : memref<2x8x32xf32, #tpu.memory_space<vmem>>, vector<1x8x32xf32>,
    %c1_68 = arith.constant 1 : index
    %c0_69 = arith.constant 0 : index
    %c0_70 = arith.constant 0 : index
    %186 = vector.load %arg7[%c1_68, %c0_69, %c0_70] : memref<2x8x32xf32, #tpu.memory_space<vmem>>, vector<1x8x32xf32>
    %187 = vector.shape_cast %186 : vector<1x8x32xf32> to vector<8x32xf32>
    %188 = vector.shape_cast %174 : vector<8x32xf32> to vector<1x8x32xf32>
    tpu.vector_store %arg7[%c1_68, %c0_69, %c0_70], %188 {strides = array<i32>} : memref<2x8x32xf32, #tpu.memory_space<vmem>>, vector<1x8x32xf32>,
    %189 = tpu.concatenate %53, %94, %135, %176 in 1 : vector<8x32xf32>, vector<8x32xf32>, vector<8x32xf32>, vector<8x32xf32> -> vector<8x128xf32>
    %c0_71 = arith.constant 0 : index
    %c0_72 = arith.constant 0 : index
    %c0_73 = arith.constant 0 : index
    %190 = vector.load %arg4[%c0_71, %c0_72, %c0_73] : memref<1x8x128xf32, #tpu.memory_space<vmem>>, vector<1x8x128xf32>
    %191 = vector.shape_cast %190 : vector<1x8x128xf32> to vector<8x128xf32>
    %192 = vector.shape_cast %189 : vector<8x128xf32> to vector<1x8x128xf32>
    tpu.vector_store %arg4[%c0_71, %c0_72, %c0_73], %192 {strides = array<i32>} : memref<1x8x128xf32, #tpu.memory_space<vmem>>, vector<1x8x128xf32>,
    %c1_i32 = arith.constant 1 : i32
    %193 = arith.cmpi eq, %arg1, %c1_i32 : i32
    %194 = arith.extui %193 : i1 to i32
    %c0_i32_74 = arith.constant 0 : i32
    %195 = arith.cmpi ne, %194, %c0_i32_74 : i32
    scf.if %195 {
      %196 = vector.shape_cast %155 : vector<8x32xf32> to vector<1x8x32xf32>
      %197 = vector.shape_cast %176 : vector<8x32xf32> to vector<1x8x32xf32>
      %198 = tpu.concatenate %196, %197 in 0 : vector<1x8x32xf32>, vector<1x8x32xf32> -> vector<2x8x32xf32>
      %199 = vector.shape_cast %153 : vector<8x32xf32> to vector<1x8x32xf32>
      %200 = vector.shape_cast %174 : vector<8x32xf32> to vector<1x8x32xf32>
      %201 = tpu.concatenate %199, %200 in 0 : vector<1x8x32xf32>, vector<1x8x32xf32> -> vector<2x8x32xf32>
      %202 = tpu.concatenate %198, %201 in 2 : vector<2x8x32xf32>, vector<2x8x32xf32> -> vector<2x8x64xf32>
      %c0_75 = arith.constant 0 : index
      %c0_76 = arith.constant 0 : index
      %c0_77 = arith.constant 0 : index
      %203 = vector.load %arg5[%c0_75, %c0_76, %c0_77] : memref<2x8x64xf32, #tpu.memory_space<vmem>>, vector<2x8x64xf32>
      tpu.vector_store %arg5[%c0_75, %c0_76, %c0_77], %202 {strides = array<i32>} : memref<2x8x64xf32, #tpu.memory_space<vmem>>, vector<2x8x64xf32>,
    } else {
    }
    return
  }
  func.func @transform_0(%arg0: i32, %arg1: i32) -> (i32, i32, i32, i32) {
    %c0_i32 = arith.constant 0 : i32
    %c0_i32_0 = arith.constant 0 : i32
    %c0_i32_1 = arith.constant 0 : i32
    return %arg1, %c0_i32, %arg0, %c0_i32_0 : i32, i32, i32, i32
  }
  func.func @transform_1(%arg0: i32, %arg1: i32) -> (i32, i32) {
    %c0_i32 = arith.constant 0 : i32
    %c0_i32_0 = arith.constant 0 : i32
    %c0_i32_1 = arith.constant 0 : i32
    return %c0_i32, %c0_i32_0 : i32, i32
  }
  func.func @transform_2(%arg0: i32, %arg1: i32) -> (i32, i32, i32) {
    %c0_i32 = arith.constant 0 : i32
    %c0_i32_0 = arith.constant 0 : i32
    return %arg1, %arg0, %c0_i32 : i32, i32, i32
  }
  func.func @transform_3(%arg0: i32, %arg1: i32) -> (i32, i32, i32) {
    %c0_i32 = arith.constant 0 : i32
    %c0_i32_0 = arith.constant 0 : i32
    %c0_i32_1 = arith.constant 0 : i32
    return %c0_i32, %arg0, %c0_i32_0 : i32, i32, i32
  }
}

</mosaic_0001>

<llo_original>
// kernel: adaptive_lstm_forward.1
$region0: #{adaptive_lstm_forward.1}
  #allocation0 [shape = 'u32[]', space=smem, size = 0x4, offset = 0x4, fixed_abs, tag = 'smem constant byte address 0x4 - core index']
  #allocation1 [shape = 'u32[144,128]{1,0:T(1,128)}', space=vmem, size = 0x12000, scoped, tag = 'internal scratch']
  #allocation2 [shape = 'f32[2,8,32]{2,1,0:T(8,128)}', space=vmem, size = 0x2000, scoped, tag = 'scratch operand']
  #allocation3 [shape = 'f32[2,8,32]{2,1,0:T(8,128)}', space=vmem, size = 0x2000, scoped, tag = 'scratch operand']
  %s0 = inlined_call_operand.vmem [shape: f32[8,2,8,128], index: 0, kind: input, shape index: {}]
  %s1 = inlined_call_operand.vmem [shape: bf16[96,128], index: 1, kind: input, shape index: {}]
  %s2 = inlined_call_operand.vmem [shape: f32[2,8,128], index: 2, kind: output, shape index: {0}]
  %s3 = inlined_call_operand.vmem [shape: f32[2,8,64], index: 3, kind: output, shape index: {1}]
  %4 = xla_tuple %s2, %s3
  %s5 = sld [smem:[#allocation0]]
  $region57: #{adaptive_lstm_forward.1} parent=0
    _
  %s7 = ssub.s32 1, %s5
  %s8 = scalar_select 0, %s7, %s5
  loop: start=0, step=1, limit=4
  $region2: #{adaptive_lstm_forward.1} parent=0 // loop_pre_header
    _
  $region3: #{adaptive_lstm_forward.1} parent=0 // loop_header
    %s10 = sphi 0, %s14
    %p11 = scmp.ge.s32.totalorder %s10, 4
    %s17 = sphi 0, %s29
    %s18 = sphi 0, %s25
    %s19 = sphi 0, %s17
    %s20 = sphi 0, %s18
    %s21 = sphi 0, %s19
    %s22 = sphi 0, %s20
    %s34 = sphi 0, %s36
    %s37 = sphi 0, %s34
    %s38 = sphi 0, %s37
    %s54 = sphi 0, %s38
    %s58 = sphi 0, %s58
    %s60 = sphi 0, %s58
    %s61 = sphi 0, %s60
    %s75 = sphi 0, %s61
    %s83 = sphi 0, %s85
    %s86 = sphi 0, %s83
    %s87 = sphi 0, %s86
    %s103 = sphi 0, %s87
    %s109 = sphi 0, %s111
    %s112 = sphi 0, %s109
    %s113 = sphi 0, %s112
    %s129 = sphi 0, %s113
  $region4: #{adaptive_lstm_forward.1} parent=0 // loop_header_branch
    %13 = sbr.rel (%p11) target = $region8
  $region5: #{adaptive_lstm_forward.1} parent=0 // loop_body
    %s15 = ssub.s32 %s10, 1
    %s16 = ssub.s32 %s10, 2
    %s23 = sadd.s32 1, %s18
    %p24 = scmp.ge.s32.totalorder %s23, 2
    %s25 = scalar_select %p24, 0, %s23
    %s26 = sadd.s32 1, %s17
    %s27 = scalar_select %p24, %s26, %s17
    %p28 = scmp.ge.s32.totalorder %s27, 1
    %s29 = scalar_select %p28, 0, %s27
    %s30 = ssub.s32 %s18, %s25
    %s31 = ssub.s32 %s17, %s29
    %s32 = sor.u32 %s30, %s31
    %p33 = scmp.eq.s32.totalorder %s32, 0
    %s35 = sadd.s32 %s34, 1
    %s36 = scalar_select %p33, %s34, %s35
    %p39 = pneg %p33
    %p40 = scmp.eq.s32.totalorder %s10, 1
    %p41 = por %p39, %p40
    %p42 = scmp.ne.s32.totalorder %s34, %s37
    %p43 = scmp.eq.s32.totalorder %s10, 0
    %p44 = por %p42, %p43
    %p45 = scmp.ne.s32.totalorder %s34, %s37
    %p46 = scmp.eq.s32.totalorder %s15, 1
    %p47 = por %p45, %p46
    %p48 = scmp.ne.s32.totalorder %s37, %s38
    %p49 = scmp.eq.s32.totalorder %s15, 0
    %p50 = por %p48, %p49
    %p51 = scmp.ne.s32.totalorder %s37, %s38
    %p52 = scmp.eq.s32.totalorder %s16, 1
    %p53 = por %p51, %p52
    %p55 = scmp.ne.s32.totalorder %s38, %s54
    %p56 = scmp.eq.s32.totalorder %s16, 0
    %p57 = por %p55, %p56
    %s59 = sadd.s32 %s58, 1
    %p62 = scmp.eq.s32.totalorder %s10, 1
    %p63 = scmp.ne.s32.totalorder %s58, %s60
    %p64 = scmp.eq.s32.totalorder %s10, 0
    %p65 = por %p63, %p64
    %p66 = scmp.ne.s32.totalorder %s58, %s60
    %p67 = scmp.eq.s32.totalorder %s15, 1
    %p68 = por %p66, %p67
    %p69 = scmp.ne.s32.totalorder %s60, %s61
    %p70 = scmp.eq.s32.totalorder %s15, 0
    %p71 = por %p69, %p70
    %p72 = scmp.ne.s32.totalorder %s60, %s61
    %p73 = scmp.eq.s32.totalorder %s16, 1
    %p74 = por %p72, %p73
    %p76 = scmp.ne.s32.totalorder %s61, %s75
    %p77 = scmp.eq.s32.totalorder %s16, 0
    %p78 = por %p76, %p77
    %s79 = ssub.s32 %s18, %s25
    %s80 = ssub.s32 %s17, %s29
    %s81 = sor.u32 %s79, %s80
    %p82 = scmp.eq.s32.totalorder %s81, 0
    %s84 = sadd.s32 %s83, 1
    %s85 = scalar_select %p82, %s83, %s84
    %p88 = pneg %p82
    %p89 = scmp.eq.s32.totalorder %s10, 1
    %p90 = por %p88, %p89
    %p91 = scmp.ne.s32.totalorder %s83, %s86
    %p92 = scmp.eq.s32.totalorder %s10, 0
    %p93 = por %p91, %p92
    %p94 = scmp.ne.s32.totalorder %s83, %s86
    %p95 = scmp.eq.s32.totalorder %s15, 1
    %p96 = por %p94, %p95
    %p97 = scmp.ne.s32.totalorder %s86, %s87
    %p98 = scmp.eq.s32.totalorder %s15, 0
    %p99 = por %p97, %p98
    %p100 = scmp.ne.s32.totalorder %s86, %s87
    %p101 = scmp.eq.s32.totalorder %s16, 1
    %p102 = por %p100, %p101
    %p104 = scmp.ne.s32.totalorder %s87, %s103
    %p105 = scmp.eq.s32.totalorder %s16, 0
    %p106 = por %p104, %p105
    %s107 = ssub.s32 %s17, %s29
    %p108 = scmp.eq.s32.totalorder %s107, 0
    %s110 = sadd.s32 %s109, 1
    %s111 = scalar_select %p108, %s109, %s110
    %p114 = pneg %p108
    %p115 = scmp.eq.s32.totalorder %s10, 1
    %p116 = por %p114, %p115
    %p117 = scmp.ne.s32.totalorder %s109, %s112
    %p118 = scmp.eq.s32.totalorder %s10, 0
    %p119 = por %p117, %p118
    %p120 = scmp.ne.s32.totalorder %s109, %s112
    %p121 = scmp.eq.s32.totalorder %s15, 1
    %p122 = por %p120, %p121
    %p123 = scmp.ne.s32.totalorder %s112, %s113
    %p124 = scmp.eq.s32.totalorder %s15, 0
    %p125 = por %p123, %p124
    %p126 = scmp.ne.s32.totalorder %s112, %s113
    %p127 = scmp.eq.s32.totalorder %s16, 1
    %p128 = por %p126, %p127
    %p130 = scmp.ne.s32.totalorder %s113, %s129
    %p131 = scmp.eq.s32.totalorder %s16, 0
    %p132 = por %p130, %p131
    %p133 = scmp.le.s32.totalorder 1, %s10
    %p134 = scmp.lt.s32.totalorder %s10, 3
    %p135 = pnand %p133, %p134
    %p136 = pneg %p135
    // Predicated region
    $region9: #{adaptive_lstm_forward.1} parent=5 // pred_check
      _
    $region10: #{adaptive_lstm_forward.1} parent=5 // pred_check_branch
      %138 = sbr.rel (%p135) target = $region12
    $region11: #{adaptive_lstm_forward.1} parent=5 // pred_region
      %s139 = ssub.s32 %s10, 1
      // Predicated region
      $region13: #{adaptive_lstm_forward.1} parent=11 // pred_check
        %p140 = pneg %p71
      $region14: #{adaptive_lstm_forward.1} parent=11 // pred_check_branch
        %142 = sbr.rel (%p140) target = $region16
      $region15: #{adaptive_lstm_forward.1} parent=11 // pred_region
        _
      $region16: #{adaptive_lstm_forward.1} parent=11 // pred_fallthru
        _
    $region12: #{adaptive_lstm_forward.1} parent=5 // pred_fallthru
      _
    %p143 = scmp.lt.s32.totalorder %s10, 2
    // Predicated region
    $region17: #{adaptive_lstm_forward.1} parent=5 // pred_check
      %p144 = pneg %p143
    $region18: #{adaptive_lstm_forward.1} parent=5 // pred_check_branch
      %146 = sbr.rel (%p144) target = $region20
    $region19: #{adaptive_lstm_forward.1} parent=5 // pred_region
      // Predicated region
      $region21: #{adaptive_lstm_forward.1} parent=19 // pred_check
        %p147 = pneg %p44
      $region22: #{adaptive_lstm_forward.1} parent=19 // pred_check_branch
        %149 = sbr.rel (%p147) target = $region24
      $region23: #{adaptive_lstm_forward.1} parent=19 // pred_region
        %s150 = smul.u32 4, %s18
        %p151 = scmp.lt.s32.totalorder %s150, 7
        %s152 = scalar_select %p151, %s150, 7
        %p153 = scmp.lt.s32.totalorder %s17, 0
        %s154 = scalar_select %p153, %s17, 0
        %s155 = smul.addr %s152, 2
        %s156 = sadd.s32 %s154, %s155
        %s157 = smul.addr %s156, 8
        %s158 = scalar_lea.vmem %s0, %s157
        %s159 = smul.u32 4, %s18
      $region24: #{adaptive_lstm_forward.1} parent=19 // pred_fallthru
        _
    $region20: #{adaptive_lstm_forward.1} parent=5 // pred_fallthru
      _
    %p160 = scmp.le.s32.totalorder 1, %s10
    %p161 = scmp.lt.s32.totalorder %s10, 3
    %p162 = pnand %p160, %p161
    %p163 = pneg %p162
    // Predicated region
    $region25: #{adaptive_lstm_forward.1} parent=5 // pred_check
      _
    $region26: #{adaptive_lstm_forward.1} parent=5 // pred_check_branch
      %165 = sbr.rel (%p162) target = $region28
    $region27: #{adaptive_lstm_forward.1} parent=5 // pred_region
      %s166 = ssub.s32 %s10, 1
      %s167 = smul.u32 4, %s20
      %p168 = scmp.lt.s32.totalorder %s167, 7
      %s169 = scalar_select %p168, %s167, 7
      %p170 = scmp.lt.s32.totalorder %s19, 0
      %s171 = scalar_select %p170, %s19, 0
      %s172 = smul.addr %s169, 2
      %s173 = sadd.s32 %s171, %s172
      %s174 = smul.addr %s173, 8
      %s175 = scalar_lea.vmem %s0, %s174
      %p176 = pneg %p50
      %p177 = pneg %p47
      %p178 = pneg %p71
      %p179 = pneg %p68
      %p180 = pneg %p99
      %p181 = pneg %p96
      %p182 = scmp.lt.s32.totalorder %s20, 1
      %s183 = scalar_select %p182, %s20, 1
      %p184 = scmp.lt.s32.totalorder %s19, 0
      %s185 = scalar_select %p184, %s19, 0
      %s186 = sadd.s32 %s185, %s183
      %s187 = smul.addr %s186, 8
      %s188 = scalar_lea.vmem %s2, %s187
      %p189 = pneg %p125
      %p190 = pneg %p122
      %p191 = scmp.lt.s32.totalorder %s19, 0
      %s192 = scalar_select %p191, %s19, 0
      %s193 = smul.addr %s192, 8
      %s194 = scalar_lea.vmem %s3, %s193
      %s195 = smul.u32 4, %s20
      %p196 = scmp.lt.s32.totalorder %s195, 7
      %s197 = scalar_select %p196, %s195, 7
      %p198 = scmp.lt.s32.totalorder %s19, 0
      %s199 = scalar_select %p198, %s19, 0
      %s200 = smul.addr %s197, 2
      %s201 = sadd.s32 %s199, %s200
      %s202 = smul.addr %s201, 8
      %s203 = scalar_lea.vmem %s0, %s202
      %s204 = smul.u32 4, %s20
      %p205 = scmp.lt.s32.totalorder %s20, 1
      %s206 = scalar_select %p205, %s20, 1
      %p207 = scmp.lt.s32.totalorder %s19, 0
      %s208 = scalar_select %p207, %s19, 0
      %s209 = sadd.s32 %s208, %s206
      %s210 = smul.addr %s209, 8
      %s211 = scalar_lea.vmem %s2, %s210
      %p212 = scmp.lt.s32.totalorder %s19, 0
      %s213 = scalar_select %p212, %s19, 0
      %s214 = smul.addr %s213, 8
      %s215 = scalar_lea.vmem %s3, %s214
      %p217 = scmp.eq.s32.totalorder %s20, 0
      // Predicated region
      $region29: #{adaptive_lstm_forward.1} parent=27 // pred_check
        %p218 = pneg %p217
      $region30: #{adaptive_lstm_forward.1} parent=27 // pred_check_branch
        %220 = sbr.rel (%p218) target = $region32
      $region31: #{adaptive_lstm_forward.1} parent=27 // pred_region
        %vm221 = vcmask 261120
        %222 = vst.msk [vmem:[#allocation2] sm:$0xff] %vm221, 0.0
        %223 = vst.msk [vmem:[#allocation2 + $0x8] sm:$0xff] %vm221, 0.0
        %224 = vst.msk [vmem:[#allocation3] sm:$0xff] %vm221, 0.0
        %225 = vst.msk [vmem:[#allocation3 + $0x8] sm:$0xff] %vm221, 0.0
      $region32: #{adaptive_lstm_forward.1} parent=27 // pred_fallthru
        _
      %v226 = vld [vmem:[%s1] sm:$0xf]
      %v227 = vld [vmem:[%s1 + $0x4] sm:$0xf]
      %v228 = vld [vmem:[%s1 + $0x8] sm:$0xf]
      %v229 = vld [vmem:[%s1 + $0xc] sm:$0xf]
      %v230 = vld [vmem:[%s1 + $0x10] sm:$0xf]
      %v231 = vld [vmem:[%s1 + $0x14] sm:$0xf]
      %v232 = vld [vmem:[%s1 + $0x18] sm:$0xf]
      %v233 = vld [vmem:[%s1 + $0x1c] sm:$0xf]
      %v234 = vld [vmem:[%s1 + $0x20] sm:$0xf]
      %v235 = vld [vmem:[%s1 + $0x24] sm:$0xf]
      %v236 = vld [vmem:[%s1 + $0x28] sm:$0xf]
      %v237 = vld [vmem:[%s1 + $0x2c] sm:$0xf]
      %v238 = vld [vmem:[#allocation2] sm:$0xff]
      %s239 = scalar_lea.vmem [#allocation2], 8
      %v240 = vld [vmem:[%s239] sm:$0xff]
      %v241 = vld [vmem:[#allocation3] sm:$0xff]
      %s242 = scalar_lea.vmem [#allocation3], 8
      %v243 = vld [vmem:[%s242] sm:$0xff]
      %v244 = vld [vmem:[%s203] sm:$0xff]
      %v245 = vpack.c.bf16 %v238, %v238
      %v250 = vunpack.c.l.b16 %v226
      %v251 = vunpack.c.l.b16 %v227
      %v252 = vunpack.c.l.b16 %v228
      %v253 = vunpack.c.l.b16 %v229
      %v254 = vpack.c.b16 %v251, %v250
      %v255 = vpack.c.b16 %v253, %v252
      %vm258 = vcmask 261120
      %v260 = vsel %vm258, %v245, 0
      %262 = vmatprep.subr.bf16.mxu0 0
      %263 = vmatpush1.bf16.msra.mxu0 0
      %264 = vmatprep.subr.bf16.mxu0 0
      %265 = vmatpush1.bf16.msra.mxu0 0
      %266 = vmatprep.subr.bf16.mxu0 0
      %267 = vmatpush1.bf16.msra.mxu0 0
      %268 = vmatprep.subr.bf16.mxu0 0
      %269 = vmatpush1.bf16.msra.mxu0 0
      %270 = vmatprep.subr.bf16.mxu0 0
      %271 = vmatpush1.bf16.msra.mxu0 0
      %272 = vmatprep.subr.bf16.mxu0 0
      %273 = vmatpush1.bf16.msra.mxu0 0
      %274 = vmatprep.subr.bf16.mxu0 0
      %275 = vmatpush1.bf16.msra.mxu0 %v255
      %276 = vmatprep.subr.bf16.mxu0 0
      %277 = vmatpush1.bf16.msra.mxu0 %v254
      %278 = vmatprep.subr.bf16.mxu0 0
      %279 = vmatpush2.bf16.msra.mxu0 0
      %280 = vmatprep.subr.bf16.mxu0 0
      %281 = vmatpush2.bf16.msra.mxu0 0
      %282 = vmatprep.subr.bf16.mxu0 0
      %283 = vmatpush2.bf16.msra.mxu0 0
      %284 = vmatprep.subr.bf16.mxu0 0
      %285 = vmatpush2.bf16.msra.mxu0 0
      %286 = vmatprep.subr.bf16.mxu0 0
      %287 = vmatpush2.bf16.msra.mxu0 0
      %288 = vmatprep.subr.bf16.mxu0 0
      %289 = vmatpush2.bf16.msra.mxu0 0
      %290 = vmatprep.subr.bf16.mxu0 0
      %291 = vmatpush2.bf16.msra.mxu0 0
      %292 = vmatprep.subr.bf16.mxu0 0
      %293 = vmatpush2.bf16.msra.mxu0 0
      %294 = vmatprep.mubr.bf16.mxu0 0
      %295 = vmatmul.mubr.bf16.gmra.mxu0 %v260
      %v296 = vpop.f32.mrf.mxu0
      %v297 = vadd.f32 0.0, %v296
      %v298 = vpop.f32.mrf.mxu0
      %v299 = vpop.f32.mrf.mxu0
      %v300 = vpop.f32.mrf.mxu0
      %301 = vdwg.mxu0
      %v302 = vadd.f32 %v244, %v297
      %v303 = vxor.u32 %v302, 2147483648
      %v304 = vmul.f32 %v303, 1.442695
      %v305 = vpow.pop %v304
      %v306 = vadd.f32 %v305, 1.0
      %v307 = vrcp.pop %v306
      %v308 = vmul.f32 1.0, %v307
      %v309 = vtanh.pop %v302
      %v310 = vmul.f32 %v308, %v241
      %312 = vrot.lane.b32.xlu0 %v309, 96
      %v313 = vpop.permute.xlu0 %312
      %v315 = vmul.f32 %v308, %v313
      %317 = vrot.lane.b32.xlu0 %v315, 96
      %v318 = vpop.permute.xlu0 %317
      %v320 = vadd.f32 %v310, %v318
      %v321 = vtanh.pop %v320
      %323 = vrot.lane.b32.xlu0 %v321, 96
      %v324 = vpop.permute.xlu0 %323
      %v326 = vmul.f32 %v308, %v324
      %s327 = scalar_lea.vmem %s203, 8
      %v328 = vld [vmem:[%s327] sm:$0xff]
      %330 = vrot.lane.b32.xlu0 %v326, 32
      %v331 = vpop.permute.xlu0 %330
      %334 = vrot.lane.b32.xlu0 %v240, 32
      %v335 = vpop.permute.xlu0 %334
      %v337 = vsel %vm258, %v331, %v335
      %v338 = vpack.c.bf16 %v337, %v337
      %v347 = vunpack.c.l.b16 %v230
      %v348 = vunpack.c.l.b16 %v231
      %v349 = vunpack.c.l.b16 %v232
      %v350 = vunpack.c.l.b16 %v233
      %v351 = vunpack.c.l.b16 %v234
      %v352 = vunpack.c.l.b16 %v235
      %v353 = vunpack.c.l.b16 %v236
      %v354 = vunpack.c.l.b16 %v237
      %v355 = vpack.c.b16 %v348, %v347
      %v356 = vpack.c.b16 %v350, %v349
      %v357 = vpack.c.b16 %v352, %v351
      %v358 = vpack.c.b16 %v354, %v353
      %vm363 = vcmask 523264
      %v365 = vsel %vm363, %v338, 0
      %367 = vmatprep.subr.bf16.mxu0 0
      %368 = vmatpush1.bf16.msra.mxu0 0
      %369 = vmatprep.subr.bf16.mxu0 0
      %370 = vmatpush1.bf16.msra.mxu0 0
      %371 = vmatprep.subr.bf16.mxu0 0
      %372 = vmatpush1.bf16.msra.mxu0 0
      %373 = vmatprep.subr.bf16.mxu0 0
      %374 = vmatpush1.bf16.msra.mxu0 0
      %375 = vmatprep.subr.bf16.mxu0 0
      %376 = vmatpush1.bf16.msra.mxu0 %v358
      %377 = vmatprep.subr.bf16.mxu0 0
      %378 = vmatpush1.bf16.msra.mxu0 %v357
      %379 = vmatprep.subr.bf16.mxu0 0
      %380 = vmatpush1.bf16.msra.mxu0 %v356
      %381 = vmatprep.subr.bf16.mxu0 0
      %382 = vmatpush1.bf16.msra.mxu0 %v355
      %383 = vmatprep.subr.bf16.mxu0 0
      %384 = vmatpush2.bf16.msra.mxu0 0
      %385 = vmatprep.subr.bf16.mxu0 0
      %386 = vmatpush2.bf16.msra.mxu0 0
      %387 = vmatprep.subr.bf16.mxu0 0
      %388 = vmatpush2.bf16.msra.mxu0 0
      %389 = vmatprep.subr.bf16.mxu0 0
      %390 = vmatpush2.bf16.msra.mxu0 0
      %391 = vmatprep.subr.bf16.mxu0 0
      %392 = vmatpush2.bf16.msra.mxu0 0
      %393 = vmatprep.subr.bf16.mxu0 0
      %394 = vmatpush2.bf16.msra.mxu0 0
      %395 = vmatprep.subr.bf16.mxu0 0
      %396 = vmatpush2.bf16.msra.mxu0 0
      %397 = vmatprep.subr.bf16.mxu0 0
      %398 = vmatpush2.bf16.msra.mxu0 0
      %399 = vmatprep.mubr.bf16.mxu0 0
      %400 = vmatmul.mubr.bf16.gmra.mxu0 %v365
      %v401 = vpop.f32.mrf.mxu0
      %v402 = vadd.f32 0.0, %v401
      %v403 = vpop.f32.mrf.mxu0
      %v404 = vpop.f32.mrf.mxu0
      %v405 = vpop.f32.mrf.mxu0
      %406 = vdwg.mxu0
      %v407 = vadd.f32 %v328, %v402
      %v408 = vxor.u32 %v407, 2147483648
      %v409 = vmul.f32 %v408, 1.442695
      %v410 = vpow.pop %v409
      %v411 = vadd.f32 %v410, 1.0
      %v412 = vrcp.pop %v411
      %v413 = vmul.f32 1.0, %v412
      %v414 = vtanh.pop %v407
      %v415 = vmul.f32 %v413, %v243
      %417 = vrot.lane.b32.xlu0 %v414, 96
      %v418 = vpop.permute.xlu0 %417
      %v420 = vmul.f32 %v413, %v418
      %422 = vrot.lane.b32.xlu0 %v420, 96
      %v423 = vpop.permute.xlu0 %422
      %v425 = vadd.f32 %v415, %v423
      %v426 = vtanh.pop %v425
      %428 = vrot.lane.b32.xlu0 %v426, 96
      %v429 = vpop.permute.xlu0 %428
      %v431 = vmul.f32 %v413, %v429
      %s432 = scalar_lea.vmem %s203, 16
      %v433 = vld [vmem:[%s432] sm:$0xff]
      %v434 = vpack.c.bf16 %v326, %v326
      %436 = vrot.lane.b32.xlu0 %v434, 32
      %v437 = vpop.permute.xlu0 %436
      %v439 = vsel %vm258, %v437, 0
      %441 = vmatprep.subr.bf16.mxu0 0
      %442 = vmatpush1.bf16.msra.mxu0 0
      %443 = vmatprep.subr.bf16.mxu0 0
      %444 = vmatpush1.bf16.msra.mxu0 0
      %445 = vmatprep.subr.bf16.mxu0 0
      %446 = vmatpush1.bf16.msra.mxu0 0
      %447 = vmatprep.subr.bf16.mxu0 0
      %448 = vmatpush1.bf16.msra.mxu0 0
      %449 = vmatprep.subr.bf16.mxu0 0
      %450 = vmatpush1.bf16.msra.mxu0 0
      %451 = vmatprep.subr.bf16.mxu0 0
      %452 = vmatpush1.bf16.msra.mxu0 0
      %453 = vmatprep.subr.bf16.mxu0 0
      %454 = vmatpush1.bf16.msra.mxu0 %v255
      %455 = vmatprep.subr.bf16.mxu0 0
      %456 = vmatpush1.bf16.msra.mxu0 %v254
      %457 = vmatprep.subr.bf16.mxu0 0
      %458 = vmatpush2.bf16.msra.mxu0 0
      %459 = vmatprep.subr.bf16.mxu0 0
      %460 = vmatpush2.bf16.msra.mxu0 0
      %461 = vmatprep.subr.bf16.mxu0 0
      %462 = vmatpush2.bf16.msra.mxu0 0
      %463 = vmatprep.subr.bf16.mxu0 0
      %464 = vmatpush2.bf16.msra.mxu0 0
      %465 = vmatprep.subr.bf16.mxu0 0
      %466 = vmatpush2.bf16.msra.mxu0 0
      %467 = vmatprep.subr.bf16.mxu0 0
      %468 = vmatpush2.bf16.msra.mxu0 0
      %469 = vmatprep.subr.bf16.mxu0 0
      %470 = vmatpush2.bf16.msra.mxu0 0
      %471 = vmatprep.subr.bf16.mxu0 0
      %472 = vmatpush2.bf16.msra.mxu0 0
      %473 = vmatprep.mubr.bf16.mxu0 0
      %474 = vmatmul.mubr.bf16.gmra.mxu0 %v439
      %v475 = vpop.f32.mrf.mxu0
      %v476 = vadd.f32 0.0, %v475
      %v477 = vpop.f32.mrf.mxu0
      %v478 = vpop.f32.mrf.mxu0
      %v479 = vpop.f32.mrf.mxu0
      %480 = vdwg.mxu0
      %v481 = vadd.f32 %v433, %v476
      %v482 = vxor.u32 %v481, 2147483648
      %v483 = vmul.f32 %v482, 1.442695
      %v484 = vpow.pop %v483
      %v485 = vadd.f32 %v484, 1.0
      %v486 = vrcp.pop %v485
      %v487 = vmul.f32 1.0, %v486
      %v488 = vtanh.pop %v481
      %v489 = vmul.f32 %v487, %v320
      %491 = vrot.lane.b32.xlu0 %v488, 96
      %v492 = vpop.permute.xlu0 %491
      %v494 = vmul.f32 %v487, %v492
      %496 = vrot.lane.b32.xlu0 %v494, 96
      %v497 = vpop.permute.xlu0 %496
      %v499 = vadd.f32 %v489, %v497
      %v500 = vtanh.pop %v499
      %502 = vrot.lane.b32.xlu0 %v500, 96
      %v503 = vpop.permute.xlu0 %502
      %v505 = vmul.f32 %v487, %v503
      %s506 = scalar_lea.vmem %s203, 24
      %v507 = vld [vmem:[%s506] sm:$0xff]
      %509 = vrot.lane.b32.xlu0 %v505, 32
      %v510 = vpop.permute.xlu0 %509
      %513 = vrot.lane.b32.xlu0 %v431, 64
      %v514 = vpop.permute.xlu0 %513
      %v516 = vsel %vm258, %v510, %v514
      %v517 = vpack.c.bf16 %v516, %v516
      %v519 = vsel %vm363, %v517, 0
      %521 = vmatprep.subr.bf16.mxu0 0
      %522 = vmatpush1.bf16.msra.mxu0 0
      %523 = vmatprep.subr.bf16.mxu0 0
      %524 = vmatpush1.bf16.msra.mxu0 0
      %525 = vmatprep.subr.bf16.mxu0 0
      %526 = vmatpush1.bf16.msra.mxu0 0
      %527 = vmatprep.subr.bf16.mxu0 0
      %528 = vmatpush1.bf16.msra.mxu0 0
      %529 = vmatprep.subr.bf16.mxu0 0
      %530 = vmatpush1.bf16.msra.mxu0 %v358
      %531 = vmatprep.subr.bf16.mxu0 0
      %532 = vmatpush1.bf16.msra.mxu0 %v357
      %533 = vmatprep.subr.bf16.mxu0 0
      %534 = vmatpush1.bf16.msra.mxu0 %v356
      %535 = vmatprep.subr.bf16.mxu0 0
      %536 = vmatpush1.bf16.msra.mxu0 %v355
      %537 = vmatprep.subr.bf16.mxu0 0
      %538 = vmatpush2.bf16.msra.mxu0 0
      %539 = vmatprep.subr.bf16.mxu0 0
      %540 = vmatpush2.bf16.msra.mxu0 0
      %541 = vmatprep.subr.bf16.mxu0 0
      %542 = vmatpush2.bf16.msra.mxu0 0
      %543 = vmatprep.subr.bf16.mxu0 0
      %544 = vmatpush2.bf16.msra.mxu0 0
      %545 = vmatprep.subr.bf16.mxu0 0
      %546 = vmatpush2.bf16.msra.mxu0 0
      %547 = vmatprep.subr.bf16.mxu0 0
      %548 = vmatpush2.bf16.msra.mxu0 0
      %549 = vmatprep.subr.bf16.mxu0 0
      %550 = vmatpush2.bf16.msra.mxu0 0
      %551 = vmatprep.subr.bf16.mxu0 0
      %552 = vmatpush2.bf16.msra.mxu0 0
      %553 = vmatprep.mubr.bf16.mxu0 0
      %554 = vmatmul.mubr.bf16.gmra.mxu0 %v519
      %v555 = vpop.f32.mrf.mxu0
      %v556 = vadd.f32 0.0, %v555
      %v557 = vpop.f32.mrf.mxu0
      %v558 = vpop.f32.mrf.mxu0
      %v559 = vpop.f32.mrf.mxu0
      %560 = vdwg.mxu0
      %v561 = vadd.f32 %v507, %v556
      %v562 = vxor.u32 %v561, 2147483648
      %v563 = vmul.f32 %v562, 1.442695
      %v564 = vpow.pop %v563
      %v565 = vadd.f32 %v564, 1.0
      %v566 = vrcp.pop %v565
      %v567 = vmul.f32 1.0, %v566
      %v568 = vtanh.pop %v561
      %v569 = vmul.f32 %v567, %v425
      %571 = vrot.lane.b32.xlu0 %v568, 96
      %v572 = vpop.permute.xlu0 %571
      %v574 = vmul.f32 %v567, %v572
      %576 = vrot.lane.b32.xlu0 %v574, 96
      %v577 = vpop.permute.xlu0 %576
      %v579 = vadd.f32 %v569, %v577
      %v580 = vtanh.pop %v579
      %582 = vrot.lane.b32.xlu0 %v580, 96
      %v583 = vpop.permute.xlu0 %582
      %v585 = vmul.f32 %v567, %v583
      %s586 = scalar_lea.vmem %s203, 32
      %v587 = vld [vmem:[%s586] sm:$0xff]
      %v588 = vpack.c.bf16 %v505, %v505
      %590 = vrot.lane.b32.xlu0 %v588, 32
      %v591 = vpop.permute.xlu0 %590
      %v593 = vsel %vm258, %v591, 0
      %595 = vmatprep.subr.bf16.mxu0 0
      %596 = vmatpush1.bf16.msra.mxu0 0
      %597 = vmatprep.subr.bf16.mxu0 0
      %598 = vmatpush1.bf16.msra.mxu0 0
      %599 = vmatprep.subr.bf16.mxu0 0
      %600 = vmatpush1.bf16.msra.mxu0 0
      %601 = vmatprep.subr.bf16.mxu0 0
      %602 = vmatpush1.bf16.msra.mxu0 0
      %603 = vmatprep.subr.bf16.mxu0 0
      %604 = vmatpush1.bf16.msra.mxu0 0
      %605 = vmatprep.subr.bf16.mxu0 0
      %606 = vmatpush1.bf16.msra.mxu0 0
      %607 = vmatprep.subr.bf16.mxu0 0
      %608 = vmatpush1.bf16.msra.mxu0 %v255
      %609 = vmatprep.subr.bf16.mxu0 0
      %610 = vmatpush1.bf16.msra.mxu0 %v254
      %611 = vmatprep.subr.bf16.mxu0 0
      %612 = vmatpush2.bf16.msra.mxu0 0
      %613 = vmatprep.subr.bf16.mxu0 0
      %614 = vmatpush2.bf16.msra.mxu0 0
      %615 = vmatprep.subr.bf16.mxu0 0
      %616 = vmatpush2.bf16.msra.mxu0 0
      %617 = vmatprep.subr.bf16.mxu0 0
      %618 = vmatpush2.bf16.msra.mxu0 0
      %619 = vmatprep.subr.bf16.mxu0 0
      %620 = vmatpush2.bf16.msra.mxu0 0
      %621 = vmatprep.subr.bf16.mxu0 0
      %622 = vmatpush2.bf16.msra.mxu0 0
      %623 = vmatprep.subr.bf16.mxu0 0
      %624 = vmatpush2.bf16.msra.mxu0 0
      %625 = vmatprep.subr.bf16.mxu0 0
      %626 = vmatpush2.bf16.msra.mxu0 0
      %627 = vmatprep.mubr.bf16.mxu0 0
      %628 = vmatmul.mubr.bf16.gmra.mxu0 %v593
      %v629 = vpop.f32.mrf.mxu0
      %v630 = vadd.f32 0.0, %v629
      %v631 = vpop.f32.mrf.mxu0
      %v632 = vpop.f32.mrf.mxu0
      %v633 = vpop.f32.mrf.mxu0
      %634 = vdwg.mxu0
      %v635 = vadd.f32 %v587, %v630
      %v636 = vxor.u32 %v635, 2147483648
      %v637 = vmul.f32 %v636, 1.442695
      %v638 = vpow.pop %v637
      %v639 = vadd.f32 %v638, 1.0
      %v640 = vrcp.pop %v639
      %v641 = vmul.f32 1.0, %v640
      %v642 = vtanh.pop %v635
      %v643 = vmul.f32 %v641, %v499
      %645 = vrot.lane.b32.xlu0 %v642, 96
      %v646 = vpop.permute.xlu0 %645
      %v648 = vmul.f32 %v641, %v646
      %650 = vrot.lane.b32.xlu0 %v648, 96
      %v651 = vpop.permute.xlu0 %650
      %v653 = vadd.f32 %v643, %v651
      %v654 = vtanh.pop %v653
      %656 = vrot.lane.b32.xlu0 %v654, 96
      %v657 = vpop.permute.xlu0 %656
      %v659 = vmul.f32 %v641, %v657
      %s660 = scalar_lea.vmem %s203, 40
      %v661 = vld [vmem:[%s660] sm:$0xff]
      %663 = vrot.lane.b32.xlu0 %v659, 32
      %v664 = vpop.permute.xlu0 %663
      %667 = vrot.lane.b32.xlu0 %v585, 64
      %v668 = vpop.permute.xlu0 %667
      %v670 = vsel %vm258, %v664, %v668
      %v671 = vpack.c.bf16 %v670, %v670
      %v673 = vsel %vm363, %v671, 0
      %675 = vmatprep.subr.bf16.mxu0 0
      %676 = vmatpush1.bf16.msra.mxu0 0
      %677 = vmatprep.subr.bf16.mxu0 0
      %678 = vmatpush1.bf16.msra.mxu0 0
      %679 = vmatprep.subr.bf16.mxu0 0
      %680 = vmatpush1.bf16.msra.mxu0 0
      %681 = vmatprep.subr.bf16.mxu0 0
      %682 = vmatpush1.bf16.msra.mxu0 0
      %683 = vmatprep.subr.bf16.mxu0 0
      %684 = vmatpush1.bf16.msra.mxu0 %v358
      %685 = vmatprep.subr.bf16.mxu0 0
      %686 = vmatpush1.bf16.msra.mxu0 %v357
      %687 = vmatprep.subr.bf16.mxu0 0
      %688 = vmatpush1.bf16.msra.mxu0 %v356
      %689 = vmatprep.subr.bf16.mxu0 0
      %690 = vmatpush1.bf16.msra.mxu0 %v355
      %691 = vmatprep.subr.bf16.mxu0 0
      %692 = vmatpush2.bf16.msra.mxu0 0
      %693 = vmatprep.subr.bf16.mxu0 0
      %694 = vmatpush2.bf16.msra.mxu0 0
      %695 = vmatprep.subr.bf16.mxu0 0
      %696 = vmatpush2.bf16.msra.mxu0 0
      %697 = vmatprep.subr.bf16.mxu0 0
      %698 = vmatpush2.bf16.msra.mxu0 0
      %699 = vmatprep.subr.bf16.mxu0 0
      %700 = vmatpush2.bf16.msra.mxu0 0
      %701 = vmatprep.subr.bf16.mxu0 0
      %702 = vmatpush2.bf16.msra.mxu0 0
      %703 = vmatprep.subr.bf16.mxu0 0
      %704 = vmatpush2.bf16.msra.mxu0 0
      %705 = vmatprep.subr.bf16.mxu0 0
      %706 = vmatpush2.bf16.msra.mxu0 0
      %707 = vmatprep.mubr.bf16.mxu0 0
      %708 = vmatmul.mubr.bf16.gmra.mxu0 %v673
      %v709 = vpop.f32.mrf.mxu0
      %v710 = vadd.f32 0.0, %v709
      %v711 = vpop.f32.mrf.mxu0
      %v712 = vpop.f32.mrf.mxu0
      %v713 = vpop.f32.mrf.mxu0
      %714 = vdwg.mxu0
      %v715 = vadd.f32 %v661, %v710
      %v716 = vxor.u32 %v715, 2147483648
      %v717 = vmul.f32 %v716, 1.442695
      %v718 = vpow.pop %v717
      %v719 = vadd.f32 %v718, 1.0
      %v720 = vrcp.pop %v719
      %v721 = vmul.f32 1.0, %v720
      %v722 = vtanh.pop %v715
      %v723 = vmul.f32 %v721, %v579
      %725 = vrot.lane.b32.xlu0 %v722, 96
      %v726 = vpop.permute.xlu0 %725
      %v728 = vmul.f32 %v721, %v726
      %730 = vrot.lane.b32.xlu0 %v728, 96
      %v731 = vpop.permute.xlu0 %730
      %v733 = vadd.f32 %v723, %v731
      %v734 = vtanh.pop %v733
      %736 = vrot.lane.b32.xlu0 %v734, 96
      %v737 = vpop.permute.xlu0 %736
      %v739 = vmul.f32 %v721, %v737
      %s740 = scalar_lea.vmem %s203, 48
      %v741 = vld [vmem:[%s740] sm:$0xff]
      %v742 = vpack.c.bf16 %v659, %v659
      %744 = vrot.lane.b32.xlu0 %v742, 32
      %v745 = vpop.permute.xlu0 %744
      %v747 = vsel %vm258, %v745, 0
      %749 = vmatprep.subr.bf16.mxu0 0
      %750 = vmatpush1.bf16.msra.mxu0 0
      %751 = vmatprep.subr.bf16.mxu0 0
      %752 = vmatpush1.bf16.msra.mxu0 0
      %753 = vmatprep.subr.bf16.mxu0 0
      %754 = vmatpush1.bf16.msra.mxu0 0
      %755 = vmatprep.subr.bf16.mxu0 0
      %756 = vmatpush1.bf16.msra.mxu0 0
      %757 = vmatprep.subr.bf16.mxu0 0
      %758 = vmatpush1.bf16.msra.mxu0 0
      %759 = vmatprep.subr.bf16.mxu0 0
      %760 = vmatpush1.bf16.msra.mxu0 0
      %761 = vmatprep.subr.bf16.mxu0 0
      %762 = vmatpush1.bf16.msra.mxu0 %v255
      %763 = vmatprep.subr.bf16.mxu0 0
      %764 = vmatpush1.bf16.msra.mxu0 %v254
      %765 = vmatprep.subr.bf16.mxu0 0
      %766 = vmatpush2.bf16.msra.mxu0 0
      %767 = vmatprep.subr.bf16.mxu0 0
      %768 = vmatpush2.bf16.msra.mxu0 0
      %769 = vmatprep.subr.bf16.mxu0 0
      %770 = vmatpush2.bf16.msra.mxu0 0
      %771 = vmatprep.subr.bf16.mxu0 0
      %772 = vmatpush2.bf16.msra.mxu0 0
      %773 = vmatprep.subr.bf16.mxu0 0
      %774 = vmatpush2.bf16.msra.mxu0 0
      %775 = vmatprep.subr.bf16.mxu0 0
      %776 = vmatpush2.bf16.msra.mxu0 0
      %777 = vmatprep.subr.bf16.mxu0 0
      %778 = vmatpush2.bf16.msra.mxu0 0
      %779 = vmatprep.subr.bf16.mxu0 0
      %780 = vmatpush2.bf16.msra.mxu0 0
      %781 = vmatprep.mubr.bf16.mxu0 0
      %782 = vmatmul.mubr.bf16.gmra.mxu0 %v747
      %v783 = vpop.f32.mrf.mxu0
      %v784 = vadd.f32 0.0, %v783
      %v785 = vpop.f32.mrf.mxu0
      %v786 = vpop.f32.mrf.mxu0
      %v787 = vpop.f32.mrf.mxu0
      %788 = vdwg.mxu0
      %v789 = vadd.f32 %v741, %v784
      %v790 = vxor.u32 %v789, 2147483648
      %v791 = vmul.f32 %v790, 1.442695
      %v792 = vpow.pop %v791
      %v793 = vadd.f32 %v792, 1.0
      %v794 = vrcp.pop %v793
      %v795 = vmul.f32 1.0, %v794
      %v796 = vtanh.pop %v789
      %v797 = vmul.f32 %v795, %v653
      %799 = vrot.lane.b32.xlu0 %v796, 96
      %v800 = vpop.permute.xlu0 %799
      %v802 = vmul.f32 %v795, %v800
      %804 = vrot.lane.b32.xlu0 %v802, 96
      %v805 = vpop.permute.xlu0 %804
      %v807 = vadd.f32 %v797, %v805
      %v808 = vtanh.pop %v807
      %810 = vrot.lane.b32.xlu0 %v808, 96
      %v811 = vpop.permute.xlu0 %810
      %v813 = vmul.f32 %v795, %v811
      %s814 = scalar_lea.vmem %s203, 56
      %v815 = vld [vmem:[%s814] sm:$0xff]
      %817 = vrot.lane.b32.xlu0 %v813, 32
      %v818 = vpop.permute.xlu0 %817
      %821 = vrot.lane.b32.xlu0 %v739, 64
      %v822 = vpop.permute.xlu0 %821
      %v824 = vsel %vm258, %v818, %v822
      %v825 = vpack.c.bf16 %v824, %v824
      %v827 = vsel %vm363, %v825, 0
      %829 = vmatprep.subr.bf16.mxu0 0
      %830 = vmatpush1.bf16.msra.mxu0 0
      %831 = vmatprep.subr.bf16.mxu0 0
      %832 = vmatpush1.bf16.msra.mxu0 0
      %833 = vmatprep.subr.bf16.mxu0 0
      %834 = vmatpush1.bf16.msra.mxu0 0
      %835 = vmatprep.subr.bf16.mxu0 0
      %836 = vmatpush1.bf16.msra.mxu0 0
      %837 = vmatprep.subr.bf16.mxu0 0
      %838 = vmatpush1.bf16.msra.mxu0 %v358
      %839 = vmatprep.subr.bf16.mxu0 0
      %840 = vmatpush1.bf16.msra.mxu0 %v357
      %841 = vmatprep.subr.bf16.mxu0 0
      %842 = vmatpush1.bf16.msra.mxu0 %v356
      %843 = vmatprep.subr.bf16.mxu0 0
      %844 = vmatpush1.bf16.msra.mxu0 %v355
      %845 = vmatprep.subr.bf16.mxu0 0
      %846 = vmatpush2.bf16.msra.mxu0 0
      %847 = vmatprep.subr.bf16.mxu0 0
      %848 = vmatpush2.bf16.msra.mxu0 0
      %849 = vmatprep.subr.bf16.mxu0 0
      %850 = vmatpush2.bf16.msra.mxu0 0
      %851 = vmatprep.subr.bf16.mxu0 0
      %852 = vmatpush2.bf16.msra.mxu0 0
      %853 = vmatprep.subr.bf16.mxu0 0
      %854 = vmatpush2.bf16.msra.mxu0 0
      %855 = vmatprep.subr.bf16.mxu0 0
      %856 = vmatpush2.bf16.msra.mxu0 0
      %857 = vmatprep.subr.bf16.mxu0 0
      %858 = vmatpush2.bf16.msra.mxu0 0
      %859 = vmatprep.subr.bf16.mxu0 0
      %860 = vmatpush2.bf16.msra.mxu0 0
      %861 = vmatprep.mubr.bf16.mxu0 0
      %862 = vmatmul.mubr.bf16.gmra.mxu0 %v827
      %v863 = vpop.f32.mrf.mxu0
      %v864 = vadd.f32 0.0, %v863
      %v865 = vpop.f32.mrf.mxu0
      %v866 = vpop.f32.mrf.mxu0
      %v867 = vpop.f32.mrf.mxu0
      %868 = vdwg.mxu0
      %v869 = vadd.f32 %v815, %v864
      %v870 = vxor.u32 %v869, 2147483648
      %v871 = vmul.f32 %v870, 1.442695
      %v872 = vpow.pop %v871
      %v873 = vadd.f32 %v872, 1.0
      %v874 = vrcp.pop %v873
      %v875 = vmul.f32 1.0, %v874
      %v876 = vtanh.pop %v869
      %v877 = vmul.f32 %v875, %v733
      %879 = vrot.lane.b32.xlu0 %v876, 96
      %v880 = vpop.permute.xlu0 %879
      %v882 = vmul.f32 %v875, %v880
      %884 = vrot.lane.b32.xlu0 %v882, 96
      %v885 = vpop.permute.xlu0 %884
      %v887 = vadd.f32 %v877, %v885
      %v888 = vtanh.pop %v887
      %890 = vrot.lane.b32.xlu0 %v888, 96
      %v891 = vpop.permute.xlu0 %890
      %v893 = vmul.f32 %v875, %v891
      %894 = vst.msk [vmem:[#allocation2] sm:$0xff] %vm258, %v818
      %895 = vst.msk [vmem:[#allocation3] sm:$0xff] %vm258, %v807
      %897 = vrot.lane.b32.xlu0 %v893, 32
      %v898 = vpop.permute.xlu0 %897
      %900 = vst.msk [vmem:[%s239] sm:$0xff] %vm258, %v898
      %901 = vst.msk [vmem:[%s242] sm:$0xff] %vm258, %v887
      %902 = vrot.lane.b32.xlu0 %v431, 32
      %v903 = vpop.permute.xlu0 %902
      %905 = vrot.lane.b32.xlu0 %v739, 96
      %v906 = vpop.permute.xlu0 %905
      %v908 = vsel %vm258, %v903, %v668
      %v909 = vsel %vm363, %v908, %v906
      %vm910 = vcmask 785408
      %v911 = vsel %vm910, %v909, %v893
      %912 = vst [vmem:[%s211] sm:$0xff] %v911
      %p913 = scmp.eq.s32.totalorder %s20, 1
      // Predicated region
      $region33: #{adaptive_lstm_forward.1} parent=27 // pred_check
        %p914 = pneg %p913
      $region34: #{adaptive_lstm_forward.1} parent=27 // pred_check_branch
        %916 = sbr.rel (%p914) target = $region36
      $region35: #{adaptive_lstm_forward.1} parent=27 // pred_region
        %919 = vrot.lane.b32.xlu0 %v807, 32
        %v920 = vpop.permute.xlu0 %919
        %921 = vrot.lane.b32.xlu0 %v887, 32
        %v922 = vpop.permute.xlu0 %921
        %v925 = vsel %vm258, %v818, %v920
        %v926 = vsel %vm258, %v898, %v922
        %927 = vst.msk [vmem:[%s215] sm:$0xff] %vm363, %v925
        %928 = vst.msk [vmem:[%s215 + $0x8] sm:$0xff] %vm363, %v926
      $region36: #{adaptive_lstm_forward.1} parent=27 // pred_fallthru
        _
      %p929 = scmp.lt.s32.totalorder %s20, 1
      %s930 = scalar_select %p929, %s20, 1
      %p931 = scmp.lt.s32.totalorder %s19, 0
      %s932 = scalar_select %p931, %s19, 0
      %s933 = sadd.s32 %s932, %s930
      %s934 = smul.addr %s933, 8
      %s935 = scalar_lea.vmem %s2, %s934
      %p936 = scmp.lt.s32.totalorder %s19, 0
      %s937 = scalar_select %p936, %s19, 0
      %s938 = smul.addr %s937, 8
      %s939 = scalar_lea.vmem %s3, %s938
      // Predicated region
      $region37: #{adaptive_lstm_forward.1} parent=27 // pred_check
        %p940 = pneg %p96
      $region38: #{adaptive_lstm_forward.1} parent=27 // pred_check_branch
        %942 = sbr.rel (%p940) target = $region40
      $region39: #{adaptive_lstm_forward.1} parent=27 // pred_region
        _
      $region40: #{adaptive_lstm_forward.1} parent=27 // pred_fallthru
        _
      // Predicated region
      $region41: #{adaptive_lstm_forward.1} parent=27 // pred_check
        %p943 = pneg %p122
      $region42: #{adaptive_lstm_forward.1} parent=27 // pred_check_branch
        %945 = sbr.rel (%p943) target = $region44
      $region43: #{adaptive_lstm_forward.1} parent=27 // pred_region
        _
      $region44: #{adaptive_lstm_forward.1} parent=27 // pred_fallthru
        _
      // Predicated region
      $region45: #{adaptive_lstm_forward.1} parent=27 // pred_check
        %p946 = pneg %p122
      $region46: #{adaptive_lstm_forward.1} parent=27 // pred_check_branch
        %948 = sbr.rel (%p946) target = $region48
      $region47: #{adaptive_lstm_forward.1} parent=27 // pred_region
        %p949 = scmp.lt.s32.totalorder %s19, 0
        %s950 = scalar_select %p949, %s19, 0
        %s951 = smul.addr %s950, 8
        %s952 = scalar_lea.vmem %s3, %s951
      $region48: #{adaptive_lstm_forward.1} parent=27 // pred_fallthru
        _
    $region28: #{adaptive_lstm_forward.1} parent=5 // pred_fallthru
      _
    %p953 = scmp.le.s32.totalorder 2, %s10
    // Predicated region
    $region49: #{adaptive_lstm_forward.1} parent=5 // pred_check
      %p954 = pneg %p953
    $region50: #{adaptive_lstm_forward.1} parent=5 // pred_check_branch
      %956 = sbr.rel (%p954) target = $region52
    $region51: #{adaptive_lstm_forward.1} parent=5 // pred_region
      %s957 = ssub.s32 %s10, 2
      // Predicated region
      $region53: #{adaptive_lstm_forward.1} parent=51 // pred_check
        %p958 = pneg %p102
      $region54: #{adaptive_lstm_forward.1} parent=51 // pred_check_branch
        %960 = sbr.rel (%p958) target = $region56
      $region55: #{adaptive_lstm_forward.1} parent=51 // pred_region
        %p961 = scmp.lt.s32.totalorder %s22, 1
        %s962 = scalar_select %p961, %s22, 1
        %p963 = scmp.lt.s32.totalorder %s21, 0
        %s964 = scalar_select %p963, %s21, 0
        %s965 = sadd.s32 %s964, %s962
        %s966 = smul.addr %s965, 8
        %s967 = scalar_lea.vmem %s2, %s966
      $region56: #{adaptive_lstm_forward.1} parent=51 // pred_fallthru
        _
    $region52: #{adaptive_lstm_forward.1} parent=5 // pred_fallthru
      _
  $region6: #{adaptive_lstm_forward.1} parent=0 // loop_footer
    %s14 = sadd.s32 1, %s10
  $region7: #{adaptive_lstm_forward.1} parent=0 // loop_footer_branch
    %9 = sbr.rel target = $region3
  $region8: #{adaptive_lstm_forward.1} parent=0 // loop_exit
    _

</llo_original>
